<compile_context>
chip_gen: v6e
topology: v6e:2x2x1
jax: 0.10.0
libtpu: 0.0.40
codegen_flags: <defaults>
</compile_context>

<pallas_src>
import functools
import math

import jax
import jax.numpy as jnp
from jax.experimental import pallas as pl
from jax.experimental.pallas import tpu as pltpu

BN_EPS = 1e-5


# ---------------------------------------------------------------------------
# Phase 1: conv (single im2col matmul) + global BN statistics accumulation.
# ---------------------------------------------------------------------------
def _conv_stats_kernel(x_ref, w_ref, out_ref, stats_ref, *, kernel_size):
    # x_ref    : (1, Hp, Wp, Cin)      bf16, zero-padded + upsampled NHWC tile
    # w_ref    : (K*K*Cin, Cpad)       bf16, im2col-ordered weight (padded Cout)
    # out_ref  : (1, H, W, Cpad)       f32  conv output tile (lane-dense)
    # stats_ref: (2, Cpad)             f32  [sum; sum of squares], global accum
    K = kernel_size
    _, Hp, Wp, Cin = x_ref.shape
    Cpad = w_ref.shape[1]
    H = Hp - (K - 1)
    W = Wp - (K - 1)

    x = x_ref[0]  # (Hp, Wp, Cin)

    if K == 1:
        patches = x.reshape(H * W, Cin)
    else:
        # im2col: concatenate the K*K taps along the channel (lane) axis so the
        # whole conv is ONE MXU matmul with contraction dim K*K*Cin.
        taps = [x[kh:kh + H, kw:kw + W, :] for kh in range(K) for kw in range(K)]
        patches = jnp.concatenate(taps, axis=-1).reshape(H * W, K * K * Cin)

    acc = jnp.dot(patches, w_ref[...], preferred_element_type=jnp.float32)

    # Lane-dense f32 store of the conv result for phase 2.
    out_ref[...] = acc.reshape(1, H, W, Cpad)

    # Per-channel sum and sum-of-squares in the same pass (var = E[x^2]-E[x]^2),
    # accumulated across the grid in a revisited output block.
    s = jnp.sum(acc, axis=0, keepdims=True)
    ss = jnp.sum(acc * acc, axis=0, keepdims=True)
    tile_stats = jnp.concatenate([s, ss], axis=0)  # (2, Cpad)

    @pl.when(pl.program_id(0) == 0)
    def _():
        stats_ref[...] = jnp.zeros_like(stats_ref)

    stats_ref[...] += tile_stats


# ---------------------------------------------------------------------------
# Phase 2: BatchNorm (training-mode, global stats) + ReLU.
# ---------------------------------------------------------------------------
def _bn_relu_kernel(conv_ref, stats_ref, gamma_ref, beta_ref, out_ref, *, count):
    # conv_ref : (1, H, W, Cpad) f32
    # stats_ref: (2, Cpad)       f32   [sum; sumsq] over all B*H*W positions
    # gamma_ref: (1, Cpad) f32,  beta_ref: (1, Cpad) f32
    x = conv_ref[...]
    stats = stats_ref[...]
    inv_n = 1.0 / count
    mean = stats[0:1, :] * inv_n                       # (1, Cpad)
    ex2 = stats[1:2, :] * inv_n
    var = ex2 - mean * mean
    scale = gamma_ref[...] * jax.lax.rsqrt(var + BN_EPS)
    shift = beta_ref[...] - mean * scale
    cpad = x.shape[-1]
    y = x * scale.reshape(1, 1, 1, cpad) + shift.reshape(1, 1, 1, cpad)
    out_ref[...] = jnp.maximum(y, 0.0)


# ---------------------------------------------------------------------------
# Wrapper: layout glue + the two pallas_calls.
# ---------------------------------------------------------------------------
def reconstruct_forward(x, w_hwio, bias, gamma, beta, *, kernel_size, scale_factor):
    """x: (B, n_patch, hidden) f32.  Returns NCHW (B, Cout, H_out, W_out) f32."""
    del bias  # Cancelled exactly by the BatchNorm mean subtraction.

    B, n_patch, hidden = x.shape
    h = int(math.isqrt(n_patch))
    assert h * h == n_patch, "n_patch must be a perfect square"
    K = kernel_size
    pad = 1 if K == 3 else 0
    Cin = hidden
    Cout = w_hwio.shape[-1]
    Cpad = ((Cout + 127) // 128) * 128  # lane-dense output channels

    # (B, n_patch, hidden) -> NHWC (B, h, w, hidden). (The PyTorch permute+view
    # to NCHW followed by our NCHW->NHWC transpose is just this reshape.)
    x_nhwc = x.reshape(B, h, h, hidden).astype(jnp.bfloat16)

    # nn.Upsample default mode = 'nearest'; then conv zero padding.
    s = scale_factor
    x_up = jnp.repeat(jnp.repeat(x_nhwc, s, axis=1), s, axis=2)
    x_padded = jnp.pad(x_up, ((0, 0), (pad, pad), (pad, pad), (0, 0)))
    Hp, Wp = x_padded.shape[1], x_padded.shape[2]
    H = Hp - (K - 1)
    W = Wp - (K - 1)

    # Weight: HWIO (K,K,Cin,Cout) -> im2col (K*K*Cin, Cpad), bf16, zero-padded.
    w2d = w_hwio.reshape(K * K * Cin, Cout).astype(jnp.bfloat16)
    w2d = jnp.pad(w2d, ((0, 0), (0, Cpad - Cout)))
    gamma_p = jnp.pad(gamma.astype(jnp.float32).reshape(1, Cout),
                      ((0, 0), (0, Cpad - Cout)))
    beta_p = jnp.pad(beta.astype(jnp.float32).reshape(1, Cout),
                     ((0, 0), (0, Cpad - Cout)))

    cparams = pltpu.CompilerParams(
        dimension_semantics=("arbitrary",),          # stats accumulator across grid
        vmem_limit_bytes=32 * 1024 * 1024,
    )

    conv_out, stats = pl.pallas_call(
        functools.partial(_conv_stats_kernel, kernel_size=K),
        out_shape=(
            jax.ShapeDtypeStruct((B, H, W, Cpad), jnp.float32),
            jax.ShapeDtypeStruct((2, Cpad), jnp.float32),
        ),
        grid=(B,),
        in_specs=[
            pl.BlockSpec((1, Hp, Wp, Cin), lambda b: (b, 0, 0, 0)),
            pl.BlockSpec((K * K * Cin, Cpad), lambda b: (0, 0)),
        ],
        out_specs=(
            pl.BlockSpec((1, H, W, Cpad), lambda b: (b, 0, 0, 0)),
            pl.BlockSpec((2, Cpad), lambda b: (0, 0)),
        ),
        compiler_params=cparams,
    )(x_padded, w2d)

    count = float(B * H * W)
    out_nhwc = pl.pallas_call(
        functools.partial(_bn_relu_kernel, count=count),
        out_shape=jax.ShapeDtypeStruct((B, H, W, Cpad), jnp.float32),
        grid=(B,),
        in_specs=[
            pl.BlockSpec((1, H, W, Cpad), lambda b: (b, 0, 0, 0)),
            pl.BlockSpec((2, Cpad), lambda b: (0, 0)),
            pl.BlockSpec((1, Cpad), lambda b: (0, 0)),
            pl.BlockSpec((1, Cpad), lambda b: (0, 0)),
        ],
        out_specs=pl.BlockSpec((1, H, W, Cpad), lambda b: (b, 0, 0, 0)),
        compiler_params=pltpu.CompilerParams(
            dimension_semantics=("parallel",),
            vmem_limit_bytes=32 * 1024 * 1024,
        ),
    )(conv_out, stats, gamma_p, beta_p)

    # Strip channel padding, back to PyTorch's NCHW convention.
    return jnp.transpose(out_nhwc[..., :Cout], (0, 3, 1, 2))


# ---------------------------------------------------------------------------
# Pure-JAX f32 reference (same math as the PyTorch module) for validation.
# ---------------------------------------------------------------------------
def _reference_forward(x, w_hwio, bias, gamma, beta, *, kernel_size, scale_factor):
    B, n_patch, hidden = x.shape
    h = int(math.isqrt(n_patch))
    x_nhwc = x.reshape(B, h, h, hidden)
    x_up = jnp.repeat(jnp.repeat(x_nhwc, scale_factor, axis=1), scale_factor, axis=2)
    pad = 1 if kernel_size == 3 else 0
    conv = jax.lax.conv_general_dilated(
        x_up, w_hwio, window_strides=(1, 1),
        padding=((pad, pad), (pad, pad)),
        dimension_numbers=("NHWC", "HWIO", "NHWC"),
    ) + bias
    mean = conv.mean(axis=(0, 1, 2), keepdims=True)
    var = ((conv - mean) ** 2).mean(axis=(0, 1, 2), keepdims=True)
    y = (conv - mean) / jnp.sqrt(var + BN_EPS) * gamma + beta
    y = jnp.maximum(y, 0.0)
    return jnp.transpose(y, (0, 3, 1, 2))


if __name__ == "__main__":
    # Small shapes consistent with the module: hidden == in_channels.
    B = 2
    n_patch = 16          # h = w = 4
    hidden = 32           # in_channels
    out_channels = 16
    kernel_size = 3
    scale_factor = 2

    key = jax.random.PRNGKey(0)
    kx, kw, kb, kg, kbt = jax.random.split(key, 5)

    x = jax.random.normal(kx, (B, n_patch, hidden), dtype=jnp.float32)

    fan_in = hidden * kernel_size * kernel_size
    w_hwio = jax.random.normal(
        kw, (kernel_size, kernel_size, hidden, out_channels), dtype=jnp.float32
    ) / jnp.sqrt(jnp.float32(fan_in))
    bias = jax.random.normal(kb, (out_channels,), dtype=jnp.float32) * 0.01
    gamma = 1.0 + 0.1 * jax.random.normal(kg, (out_channels,), dtype=jnp.float32)
    beta = 0.1 * jax.random.normal(kbt, (out_channels,), dtype=jnp.float32)

    out = reconstruct_forward(
        x, w_hwio, bias, gamma, beta,
        kernel_size=kernel_size, scale_factor=scale_factor,
    )
    out = jax.block_until_ready(out)

    ref = _reference_forward(
        x, w_hwio, bias, gamma, beta,
        kernel_size=kernel_size, scale_factor=scale_factor,
    )

    assert out.shape == (B, out_channels, 8, 8), out.shape
    # bf16 MXU inputs with f32 accumulation vs an all-f32 reference.
    assert bool(jnp.allclose(out, ref, atol=3e-2, rtol=3e-2)), (
        "mismatch vs reference: max abs diff = "
        f"{float(jnp.max(jnp.abs(out - ref)))}"
    )

    print("KERNEL_OK")
</pallas_src>

<mosaic_0001>
module attributes {stable_mosaic.version = 11 : i64} {
  func.func @_conv_stats_kernel(%arg0: i32, %arg1: memref<1x10x10x32xbf16, #tpu.memory_space<vmem>>, %arg2: memref<288x128xbf16, #tpu.memory_space<vmem>>, %arg3: memref<1x8x8x128xf32, #tpu.memory_space<vmem>>, %arg4: memref<2x128xf32, #tpu.memory_space<vmem>>) attributes {dimension_semantics = [#tpu.dimension_semantics<arbitrary>], iteration_bounds = array<i64: 2>, scalar_prefetch = 0 : i64, scratch_operands = 0 : i64, tpu.core_type = #tpu.core_type<tc>, window_params = [{transform_indices = @transform_0, window_bounds = array<i64: 1, 10, 10, 32>}, {pipeline_mode = #tpu.pipeline_mode<synchronous>, transform_indices = @transform_1, window_bounds = array<i64: 288, 128>}, {transform_indices = @transform_2, window_bounds = array<i64: 1, 8, 8, 128>}, {pipeline_mode = #tpu.pipeline_mode<synchronous>, transform_indices = @transform_3, window_bounds = array<i64: 2, 128>}]} {
    %c0 = arith.constant 0 : index
    %c0_0 = arith.constant 0 : index
    %c0_1 = arith.constant 0 : index
    %c0_2 = arith.constant 0 : index
    %0 = vector.load %arg1[%c0, %c0_0, %c0_1, %c0_2] : memref<1x10x10x32xbf16, #tpu.memory_space<vmem>>, vector<1x10x10x32xbf16>
    %1 = vector.shape_cast %0 : vector<1x10x10x32xbf16> to vector<10x10x32xbf16>
    %2 = vector.extract_strided_slice %1 {offsets = [0, 0, 0], sizes = [8, 8, 32], strides = [1, 1, 1]} : vector<10x10x32xbf16> to vector<8x8x32xbf16>
    %3 = vector.extract_strided_slice %1 {offsets = [0, 1, 0], sizes = [8, 8, 32], strides = [1, 1, 1]} : vector<10x10x32xbf16> to vector<8x8x32xbf16>
    %4 = vector.extract_strided_slice %1 {offsets = [0, 2, 0], sizes = [8, 8, 32], strides = [1, 1, 1]} : vector<10x10x32xbf16> to vector<8x8x32xbf16>
    %5 = vector.extract_strided_slice %1 {offsets = [1, 0, 0], sizes = [8, 8, 32], strides = [1, 1, 1]} : vector<10x10x32xbf16> to vector<8x8x32xbf16>
    %6 = vector.extract_strided_slice %1 {offsets = [1, 1, 0], sizes = [8, 8, 32], strides = [1, 1, 1]} : vector<10x10x32xbf16> to vector<8x8x32xbf16>
    %7 = vector.extract_strided_slice %1 {offsets = [1, 2, 0], sizes = [8, 8, 32], strides = [1, 1, 1]} : vector<10x10x32xbf16> to vector<8x8x32xbf16>
    %8 = vector.extract_strided_slice %1 {offsets = [2, 0, 0], sizes = [8, 8, 32], strides = [1, 1, 1]} : vector<10x10x32xbf16> to vector<8x8x32xbf16>
    %9 = vector.extract_strided_slice %1 {offsets = [2, 1, 0], sizes = [8, 8, 32], strides = [1, 1, 1]} : vector<10x10x32xbf16> to vector<8x8x32xbf16>
    %10 = vector.extract_strided_slice %1 {offsets = [2, 2, 0], sizes = [8, 8, 32], strides = [1, 1, 1]} : vector<10x10x32xbf16> to vector<8x8x32xbf16>
    %11 = tpu.concatenate %2, %3, %4, %5, %6, %7, %8, %9, %10 in 2 : vector<8x8x32xbf16>, vector<8x8x32xbf16>, vector<8x8x32xbf16>, vector<8x8x32xbf16>, vector<8x8x32xbf16>, vector<8x8x32xbf16>, vector<8x8x32xbf16>, vector<8x8x32xbf16>, vector<8x8x32xbf16> -> vector<8x8x288xbf16>
    %12 = vector.shape_cast %11 : vector<8x8x288xbf16> to vector<64x288xbf16>
    %c0_3 = arith.constant 0 : index
    %c0_4 = arith.constant 0 : index
    %13 = vector.load %arg2[%c0_3, %c0_4] : memref<288x128xbf16, #tpu.memory_space<vmem>>, vector<288x128xbf16>
    %cst = arith.constant dense<0.000000e+00> : vector<64x128xf32>
    %14 = tpu.matmul %12, %13, %cst {dimension_numbers = #tpu.dot_dimension_numbers<[1], [0], [0], [1], [0, 0, 1, 1], [], []>} : vector<64x288xbf16>, vector<288x128xbf16>, vector<64x128xf32> -> vector<64x128xf32>
    %15 = vector.shape_cast %14 : vector<64x128xf32> to vector<1x8x8x128xf32>
    %c0_5 = arith.constant 0 : index
    %c0_6 = arith.constant 0 : index
    %c0_7 = arith.constant 0 : index
    %c0_8 = arith.constant 0 : index
    %16 = vector.load %arg3[%c0_5, %c0_6, %c0_7, %c0_8] : memref<1x8x8x128xf32, #tpu.memory_space<vmem>>, vector<1x8x8x128xf32>
    tpu.vector_store %arg3[%c0_5, %c0_6, %c0_7, %c0_8], %15 {strides = array<i32>} : memref<1x8x8x128xf32, #tpu.memory_space<vmem>>, vector<1x8x8x128xf32>,
    %cst_9 = arith.constant dense<0.000000e+00> : vector<128xf32>
    %17 = vector.multi_reduction <add>, %14, %cst_9 [0] : vector<64x128xf32> to vector<128xf32>
    %18 = vector.shape_cast %17 : vector<128xf32> to vector<1x128xf32>
    %19 = arith.mulf %14, %14 : vector<64x128xf32>
    %cst_10 = arith.constant dense<0.000000e+00> : vector<128xf32>
    %20 = vector.multi_reduction <add>, %19, %cst_10 [0] : vector<64x128xf32> to vector<128xf32>
    %21 = vector.shape_cast %20 : vector<128xf32> to vector<1x128xf32>
    %22 = tpu.concatenate %18, %21 in 0 : vector<1x128xf32>, vector<1x128xf32> -> vector<2x128xf32>
    %c0_i32 = arith.constant 0 : i32
    %23 = arith.cmpi eq, %arg0, %c0_i32 : i32
    %24 = arith.extui %23 : i1 to i32
    %c0_i32_11 = arith.constant 0 : i32
    %25 = arith.cmpi ne, %24, %c0_i32_11 : i32
    scf.if %25 {
      %cst_16 = arith.constant 0.000000e+00 : f32
      %29 = vector.broadcast %cst_16 : f32 to vector<2x128xf32>
      %c0_17 = arith.constant 0 : index
      %c0_18 = arith.constant 0 : index
      %30 = vector.load %arg4[%c0_17, %c0_18] : memref<2x128xf32, #tpu.memory_space<vmem>>, vector<2x128xf32>
      tpu.vector_store %arg4[%c0_17, %c0_18], %29 {strides = array<i32>} : memref<2x128xf32, #tpu.memory_space<vmem>>, vector<2x128xf32>,
    } else {
    }
    %c0_12 = arith.constant 0 : index
    %c0_13 = arith.constant 0 : index
    %26 = vector.load %arg4[%c0_12, %c0_13] : memref<2x128xf32, #tpu.memory_space<vmem>>, vector<2x128xf32>
    %27 = arith.addf %26, %22 : vector<2x128xf32>
    %c0_14 = arith.constant 0 : index
    %c0_15 = arith.constant 0 : index
    %28 = vector.load %arg4[%c0_14, %c0_15] : memref<2x128xf32, #tpu.memory_space<vmem>>, vector<2x128xf32>
    tpu.vector_store %arg4[%c0_14, %c0_15], %27 {strides = array<i32>} : memref<2x128xf32, #tpu.memory_space<vmem>>, vector<2x128xf32>,
    return
  }
  func.func @transform_0(%arg0: i32) -> (i32, i32, i32, i32) {
    %c0_i32 = arith.constant 0 : i32
    %c0_i32_0 = arith.constant 0 : i32
    %c0_i32_1 = arith.constant 0 : i32
    %c0_i32_2 = arith.constant 0 : i32
    return %arg0, %c0_i32, %c0_i32_0, %c0_i32_1 : i32, i32, i32, i32
  }
  func.func @transform_1(%arg0: i32) -> (i32, i32) {
    %c0_i32 = arith.constant 0 : i32
    %c0_i32_0 = arith.constant 0 : i32
    %c0_i32_1 = arith.constant 0 : i32
    return %c0_i32, %c0_i32_0 : i32, i32
  }
  func.func @transform_2(%arg0: i32) -> (i32, i32, i32, i32) {
    %c0_i32 = arith.constant 0 : i32
    %c0_i32_0 = arith.constant 0 : i32
    %c0_i32_1 = arith.constant 0 : i32
    %c0_i32_2 = arith.constant 0 : i32
    return %arg0, %c0_i32, %c0_i32_0, %c0_i32_1 : i32, i32, i32, i32
  }
  func.func @transform_3(%arg0: i32) -> (i32, i32) {
    %c0_i32 = arith.constant 0 : i32
    %c0_i32_0 = arith.constant 0 : i32
    %c0_i32_1 = arith.constant 0 : i32
    return %c0_i32, %c0_i32_0 : i32, i32
  }
}

</mosaic_0001>

<llo_original>
// kernel: tpu_custom_call.1
$region0: #{tpu_custom_call.1}
  #allocation0 [shape = 'u32[]', space=smem, size = 0x4, offset = 0x4, fixed_abs, tag = 'smem constant byte address 0x4 - core index']
  #allocation1 [shape = 'u32[144,128]{1,0:T(1,128)}', space=vmem, size = 0x12000, scoped, tag = 'internal scratch']
  %s0 = inlined_call_operand.vmem [shape: bf16[2,10,10,32], index: 0, kind: input, shape index: {}]
  %s1 = inlined_call_operand.vmem [shape: bf16[288,128], index: 1, kind: input, shape index: {}]
  %s2 = inlined_call_operand.hbm [shape: f32[2,8,8,128], index: 2, kind: output, shape index: {0}]
  %s3 = inlined_call_operand.hbm [shape: f32[2,128], index: 3, kind: output, shape index: {1}]
  %4 = xla_tuple %s2, %s3
  %s5 = sld [smem:[#allocation0]]
  $region53: #{tpu_custom_call.1} parent=0
    _
  %s7 = ssub.s32 1, %s5
  %s8 = scalar_select 0, %s7, %s5
  $region1: #{tpu_custom_call.1} parent=0
    #allocation2 [shape = 'u8[65536]{0}', space=vmem, size = 0x10000, scoped, tag = 'output window, operand 0']
    #allocation3 [shape = 's32[2]{0}', space=sflag, size = 0x8, scoped, tag = 'scoped memory for tpu_custom_call.1']
    #allocation4 [shape = 'u8[1024]{0}', space=vmem, size = 0x400, scoped, tag = 'output window, operand 1, single buffered']
    #allocation5 [shape = 's32[1]{0}', space=sflag, size = 0x4, scoped, tag = 'scoped memory for tpu_custom_call.1']
    %9 = vsyncpa [#allocation3], 0
    %s10 = scalar_lea.sflag [#allocation3], 1
    %11 = vsyncpa %s10, 0
    %12 = vsyncpa [#allocation5], 0
    loop: start=0, step=1, limit=4
    $region2: #{tpu_custom_call.1} parent=1 // loop_pre_header
      _
    $region3: #{tpu_custom_call.1} parent=1 // loop_header
      %s14 = sphi 0, %s18
      %p15 = scmp.ge.s32.totalorder %s14, 4
      %s24 = sphi 0, %s26
      %s27 = sphi 0, %s24
      %s28 = sphi 0, %s27
      %s44 = sphi 0, %s28
      %s48 = sphi 0, %s48
      %s50 = sphi 0, %s48
      %s51 = sphi 0, %s50
      %s65 = sphi 0, %s51
      %s71 = sphi 0, %s73
      %s74 = sphi 0, %s71
      %s75 = sphi 0, %s74
      %s91 = sphi 0, %s75
      %s95 = sphi 0, %s95
      %s97 = sphi 0, %s95
      %s98 = sphi 0, %s97
      %s112 = sphi 0, %s98
    $region4: #{tpu_custom_call.1} parent=1 // loop_header_branch
      %17 = sbr.rel (%p15) target = $region8
    $region5: #{tpu_custom_call.1} parent=1 // loop_body
      %s19 = ssub.s32 %s14, 1
      %s20 = ssub.s32 %s14, 2
      %s21 = sadd.s32 %s14, 1
      %s22 = ssub.s32 %s14, %s21
      %p23 = scmp.eq.s32.totalorder %s22, 0
      %s25 = sadd.s32 %s24, 1
      %s26 = scalar_select %p23, %s24, %s25
      %p29 = pneg %p23
      %p30 = scmp.eq.s32.totalorder %s14, 1
      %p31 = por %p29, %p30
      %p32 = scmp.ne.s32.totalorder %s24, %s27
      %p33 = scmp.eq.s32.totalorder %s14, 0
      %p34 = por %p32, %p33
      %p35 = scmp.ne.s32.totalorder %s24, %s27
      %p36 = scmp.eq.s32.totalorder %s19, 1
      %p37 = por %p35, %p36
      %p38 = scmp.ne.s32.totalorder %s27, %s28
      %p39 = scmp.eq.s32.totalorder %s19, 0
      %p40 = por %p38, %p39
      %p41 = scmp.ne.s32.totalorder %s27, %s28
      %p42 = scmp.eq.s32.totalorder %s20, 1
      %p43 = por %p41, %p42
      %p45 = scmp.ne.s32.totalorder %s28, %s44
      %p46 = scmp.eq.s32.totalorder %s20, 0
      %p47 = por %p45, %p46
      %s49 = sadd.s32 %s48, 1
      %p52 = scmp.eq.s32.totalorder %s14, 1
      %p53 = scmp.ne.s32.totalorder %s48, %s50
      %p54 = scmp.eq.s32.totalorder %s14, 0
      %p55 = por %p53, %p54
      %p56 = scmp.ne.s32.totalorder %s48, %s50
      %p57 = scmp.eq.s32.totalorder %s19, 1
      %p58 = por %p56, %p57
      %p59 = scmp.ne.s32.totalorder %s50, %s51
      %p60 = scmp.eq.s32.totalorder %s19, 0
      %p61 = por %p59, %p60
      %p62 = scmp.ne.s32.totalorder %s50, %s51
      %p63 = scmp.eq.s32.totalorder %s20, 1
      %p64 = por %p62, %p63
      %p66 = scmp.ne.s32.totalorder %s51, %s65
      %p67 = scmp.eq.s32.totalorder %s20, 0
      %p68 = por %p66, %p67
      %s69 = ssub.s32 %s14, %s21
      %p70 = scmp.eq.s32.totalorder %s69, 0
      %s72 = sadd.s32 %s71, 1
      %s73 = scalar_select %p70, %s71, %s72
      %p76 = pneg %p70
      %p77 = scmp.eq.s32.totalorder %s14, 1
      %p78 = por %p76, %p77
      %p79 = scmp.ne.s32.totalorder %s71, %s74
      %p80 = scmp.eq.s32.totalorder %s14, 0
      %p81 = por %p79, %p80
      %p82 = scmp.ne.s32.totalorder %s71, %s74
      %p83 = scmp.eq.s32.totalorder %s19, 1
      %p84 = por %p82, %p83
      %p85 = scmp.ne.s32.totalorder %s74, %s75
      %p86 = scmp.eq.s32.totalorder %s19, 0
      %p87 = por %p85, %p86
      %p88 = scmp.ne.s32.totalorder %s74, %s75
      %p89 = scmp.eq.s32.totalorder %s20, 1
      %p90 = por %p88, %p89
      %p92 = scmp.ne.s32.totalorder %s75, %s91
      %p93 = scmp.eq.s32.totalorder %s20, 0
      %p94 = por %p92, %p93
      %s96 = sadd.s32 %s95, 1
      %p99 = scmp.eq.s32.totalorder %s14, 1
      %p100 = scmp.ne.s32.totalorder %s95, %s97
      %p101 = scmp.eq.s32.totalorder %s14, 0
      %p102 = por %p100, %p101
      %p103 = scmp.ne.s32.totalorder %s95, %s97
      %p104 = scmp.eq.s32.totalorder %s19, 1
      %p105 = por %p103, %p104
      %p106 = scmp.ne.s32.totalorder %s97, %s98
      %p107 = scmp.eq.s32.totalorder %s19, 0
      %p108 = por %p106, %p107
      %p109 = scmp.ne.s32.totalorder %s97, %s98
      %p110 = scmp.eq.s32.totalorder %s20, 1
      %p111 = por %p109, %p110
      %p113 = scmp.ne.s32.totalorder %s98, %s112
      %p114 = scmp.eq.s32.totalorder %s20, 0
      %p115 = por %p113, %p114
      %p116 = scmp.le.s32.totalorder 1, %s14
      %p117 = scmp.lt.s32.totalorder %s14, 3
      %p118 = pnand %p116, %p117
      %p119 = pneg %p118
      // Predicated region
      $region9: #{tpu_custom_call.1} parent=5 // pred_check
        _
      $region10: #{tpu_custom_call.1} parent=5 // pred_check_branch
        %121 = sbr.rel (%p118) target = $region12
      $region11: #{tpu_custom_call.1} parent=5 // pred_region
        %s122 = ssub.s32 %s14, 1
        // Predicated region
        $region13: #{tpu_custom_call.1} parent=11 // pred_check
          %p123 = pneg %p61
        $region14: #{tpu_custom_call.1} parent=11 // pred_check_branch
          %125 = sbr.rel (%p123) target = $region16
        $region15: #{tpu_custom_call.1} parent=11 // pred_region
          _
        $region16: #{tpu_custom_call.1} parent=11 // pred_fallthru
          _
      $region12: #{tpu_custom_call.1} parent=5 // pred_fallthru
        _
      %p126 = scmp.lt.s32.totalorder %s14, 2
      // Predicated region
      $region17: #{tpu_custom_call.1} parent=5 // pred_check
        %p127 = pneg %p126
      $region18: #{tpu_custom_call.1} parent=5 // pred_check_branch
        %129 = sbr.rel (%p127) target = $region20
      $region19: #{tpu_custom_call.1} parent=5 // pred_region
        // Predicated region
        $region21: #{tpu_custom_call.1} parent=19 // pred_check
          %p130 = pneg %p34
        $region22: #{tpu_custom_call.1} parent=19 // pred_check_branch
          %132 = sbr.rel (%p130) target = $region24
        $region23: #{tpu_custom_call.1} parent=19 // pred_region
          %p133 = scmp.lt.s32.totalorder %s14, 1
          %s134 = scalar_select %p133, %s14, 1
          %s135 = smul.addr %s134, 20
          %s136 = smul.addr %s135, 4
          %s137 = scalar_lea.vmem %s0, %s136
        $region24: #{tpu_custom_call.1} parent=19 // pred_fallthru
          _
      $region20: #{tpu_custom_call.1} parent=5 // pred_fallthru
        _
      %p138 = scmp.le.s32.totalorder 1, %s14
      %p139 = scmp.lt.s32.totalorder %s14, 3
      %p140 = pnand %p138, %p139
      %p141 = pneg %p140
      // Predicated region
      $region25: #{tpu_custom_call.1} parent=5 // pred_check
        _
      $region26: #{tpu_custom_call.1} parent=5 // pred_check_branch
        %143 = sbr.rel (%p140) target = $region28
      $region27: #{tpu_custom_call.1} parent=5 // pred_region
        %s144 = ssub.s32 %s14, 1
        %p145 = scmp.lt.s32.totalorder %s19, 1
        %s146 = scalar_select %p145, %s19, 1
        %s147 = smul.addr %s146, 20
        %s148 = smul.addr %s147, 4
        %s149 = scalar_lea.vmem %s0, %s148
        %p150 = pneg %p40
        %p151 = pneg %p37
        %p152 = pneg %p61
        %p153 = pneg %p58
        %p154 = pneg %p87
        %p155 = pneg %p84
        %s156 = sand.u32 %s74, 1
        %s157 = scalar_lea.sflag [#allocation3], %s156
        %s158 = sand.u32 %s74, 1
        %s159 = smul.addr %s158, 64
        %s160 = scalar_lea.vmem [#allocation2], %s159
        %p161 = pneg %p108
        %p162 = pneg %p105
        %p163 = scmp.lt.s32.totalorder %s19, 1
        %s164 = scalar_select %p163, %s19, 1
        %s165 = smul.addr %s164, 20
        %s166 = smul.addr %s165, 4
        %s167 = scalar_lea.vmem %s0, %s166
        %v169 = vld [vmem:[%s167] sm:$0xf]
        %v170 = vld [vmem:[%s167 + $0x4] sm:$0x1]
        %v171 = vld [vmem:[%s167 + $0x8] sm:$0xf]
        %v172 = vld [vmem:[%s167 + $0xc] sm:$0x1]
        %v173 = vld [vmem:[%s167 + $0x10] sm:$0xf]
        %v174 = vld [vmem:[%s167 + $0x14] sm:$0x1]
        %v175 = vld [vmem:[%s167 + $0x18] sm:$0xf]
        %v176 = vld [vmem:[%s167 + $0x1c] sm:$0x1]
        %v177 = vld [vmem:[%s167 + $0x20] sm:$0xf]
        %v178 = vld [vmem:[%s167 + $0x24] sm:$0x1]
        %v179 = vld [vmem:[%s167 + $0x28] sm:$0xf]
        %v180 = vld [vmem:[%s167 + $0x2c] sm:$0x1]
        %v181 = vld [vmem:[%s167 + $0x30] sm:$0xf]
        %v182 = vld [vmem:[%s167 + $0x34] sm:$0x1]
        %v183 = vld [vmem:[%s167 + $0x38] sm:$0xf]
        %v184 = vld [vmem:[%s167 + $0x3c] sm:$0x1]
        %v185 = vld [vmem:[%s167 + $0x40] sm:$0xf]
        %v186 = vld [vmem:[%s167 + $0x44] sm:$0x1]
        %v187 = vld [vmem:[%s167 + $0x48] sm:$0xf]
        %v188 = vld [vmem:[%s167 + $0x4c] sm:$0x1]
        %v205 = vunpack.c.l.b16 %v169
        %v206 = vunpack.c.l.b16 %v170
        %v207 = vunpack.c.l.b16 %v171
        %v208 = vunpack.c.l.b16 %v172
        %v209 = vunpack.c.l.b16 %v173
        %v210 = vunpack.c.l.b16 %v174
        %v211 = vunpack.c.l.b16 %v175
        %v212 = vunpack.c.l.b16 %v176
        %v213 = vunpack.c.l.b16 %v177
        %v214 = vunpack.c.l.b16 %v178
        %v215 = vunpack.c.l.b16 %v179
        %v216 = vunpack.c.l.b16 %v180
        %v217 = vunpack.c.l.b16 %v181
        %v218 = vunpack.c.l.b16 %v182
        %v219 = vunpack.c.l.b16 %v183
        %v220 = vunpack.c.l.b16 %v184
        %v221 = vpack.c.b16 %v206, %v205
        %v222 = vpack.c.b16 %v208, %v207
        %v223 = vpack.c.b16 %v210, %v209
        %v224 = vpack.c.b16 %v212, %v211
        %v225 = vpack.c.b16 %v214, %v213
        %v226 = vpack.c.b16 %v216, %v215
        %v227 = vpack.c.b16 %v218, %v217
        %v228 = vpack.c.b16 %v220, %v219
        %v230 = vshrl.u32 %v221, 16
        %v232 = vshll.u32 %v221, 16
        %v234 = vrot.slane %v232, 1
        %v235 = vor.u32 %v230, %v234
        %v237 = vshrl.u32 %v222, 16
        %v239 = vshll.u32 %v222, 16
        %v241 = vrot.slane %v239, 1
        %v242 = vor.u32 %v237, %v241
        %v244 = vshrl.u32 %v223, 16
        %v246 = vshll.u32 %v223, 16
        %v248 = vrot.slane %v246, 1
        %v249 = vor.u32 %v244, %v248
        %v251 = vshrl.u32 %v224, 16
        %v253 = vshll.u32 %v224, 16
        %v255 = vrot.slane %v253, 1
        %v256 = vor.u32 %v251, %v255
        %v258 = vshrl.u32 %v225, 16
        %v260 = vshll.u32 %v225, 16
        %v262 = vrot.slane %v260, 1
        %v263 = vor.u32 %v258, %v262
        %v265 = vshrl.u32 %v226, 16
        %v267 = vshll.u32 %v226, 16
        %v269 = vrot.slane %v267, 1
        %v270 = vor.u32 %v265, %v269
        %v272 = vshrl.u32 %v227, 16
        %v274 = vshll.u32 %v227, 16
        %v276 = vrot.slane %v274, 1
        %v277 = vor.u32 %v272, %v276
        %v279 = vshrl.u32 %v228, 16
        %v281 = vshll.u32 %v228, 16
        %v283 = vrot.slane %v281, 1
        %v284 = vor.u32 %v279, %v283
        %285 = vrot.lane.b32.xlu0 %v235, 32
        %v286 = vpop.permute.xlu0 %285
        %287 = vrot.lane.b32.xlu0 %v242, 32
        %v288 = vpop.permute.xlu0 %287
        %289 = vrot.lane.b32.xlu0 %v249, 32
        %v290 = vpop.permute.xlu0 %289
        %291 = vrot.lane.b32.xlu0 %v256, 32
        %v292 = vpop.permute.xlu0 %291
        %293 = vrot.lane.b32.xlu0 %v263, 32
        %v294 = vpop.permute.xlu0 %293
        %295 = vrot.lane.b32.xlu0 %v270, 32
        %v296 = vpop.permute.xlu0 %295
        %297 = vrot.lane.b32.xlu0 %v277, 32
        %v298 = vpop.permute.xlu0 %297
        %299 = vrot.lane.b32.xlu0 %v284, 32
        %v300 = vpop.permute.xlu0 %299
        %v301 = vrot.slane %v221, 1
        %v302 = vrot.slane %v222, 1
        %v303 = vrot.slane %v223, 1
        %v304 = vrot.slane %v224, 1
        %v305 = vrot.slane %v225, 1
        %v306 = vrot.slane %v226, 1
        %v307 = vrot.slane %v227, 1
        %v308 = vrot.slane %v228, 1
        %309 = vrot.lane.b32.xlu0 %v301, 64
        %v310 = vpop.permute.xlu0 %309
        %311 = vrot.lane.b32.xlu0 %v302, 64
        %v312 = vpop.permute.xlu0 %311
        %313 = vrot.lane.b32.xlu0 %v303, 64
        %v314 = vpop.permute.xlu0 %313
        %315 = vrot.lane.b32.xlu0 %v304, 64
        %v316 = vpop.permute.xlu0 %315
        %317 = vrot.lane.b32.xlu0 %v305, 64
        %v318 = vpop.permute.xlu0 %317
        %319 = vrot.lane.b32.xlu0 %v306, 64
        %v320 = vpop.permute.xlu0 %319
        %321 = vrot.lane.b32.xlu0 %v307, 64
        %v322 = vpop.permute.xlu0 %321
        %323 = vrot.lane.b32.xlu0 %v308, 64
        %v324 = vpop.permute.xlu0 %323
        %v326 = vunpack.c.l.b16 %v185
        %v327 = vpack.c.b16 %v207, %v207
        %v328 = vpack.c.b16 %v209, %v209
        %v329 = vpack.c.b16 %v211, %v211
        %v330 = vpack.c.b16 %v213, %v213
        %v331 = vpack.c.b16 %v215, %v215
        %v332 = vpack.c.b16 %v217, %v217
        %v333 = vpack.c.b16 %v219, %v219
        %v334 = vpack.c.b16 %v326, %v326
        %335 = vrot.lane.b32.xlu0 %v327, 96
        %v336 = vpop.permute.xlu0 %335
        %337 = vrot.lane.b32.xlu0 %v328, 96
        %v338 = vpop.permute.xlu0 %337
        %339 = vrot.lane.b32.xlu0 %v329, 96
        %v340 = vpop.permute.xlu0 %339
        %341 = vrot.lane.b32.xlu0 %v330, 96
        %v342 = vpop.permute.xlu0 %341
        %343 = vrot.lane.b32.xlu0 %v331, 96
        %v344 = vpop.permute.xlu0 %343
        %345 = vrot.lane.b32.xlu0 %v332, 96
        %v346 = vpop.permute.xlu0 %345
        %347 = vrot.lane.b32.xlu0 %v333, 96
        %v348 = vpop.permute.xlu0 %347
        %349 = vrot.lane.b32.xlu0 %v334, 96
        %v350 = vpop.permute.xlu0 %349
        %v352 = vunpack.c.l.b16 %v186
        %v353 = vpack.c.b16 %v352, %v326
        %v355 = vshrl.u32 %v353, 16
        %v357 = vshll.u32 %v353, 16
        %v359 = vrot.slane %v357, 1
        %v360 = vor.u32 %v355, %v359
        %v361 = vrot.slane %v353, 1
        %362 = vrot.lane.b32.xlu0 %v302, 32
        %v363 = vpop.permute.xlu0 %362
        %364 = vrot.lane.b32.xlu0 %v303, 32
        %v365 = vpop.permute.xlu0 %364
        %366 = vrot.lane.b32.xlu0 %v304, 32
        %v367 = vpop.permute.xlu0 %366
        %368 = vrot.lane.b32.xlu0 %v305, 32
        %v369 = vpop.permute.xlu0 %368
        %370 = vrot.lane.b32.xlu0 %v306, 32
        %v371 = vpop.permute.xlu0 %370
        %372 = vrot.lane.b32.xlu0 %v307, 32
        %v373 = vpop.permute.xlu0 %372
        %374 = vrot.lane.b32.xlu0 %v308, 32
        %v375 = vpop.permute.xlu0 %374
        %376 = vrot.lane.b32.xlu0 %v361, 32
        %v377 = vpop.permute.xlu0 %376
        %v379 = vunpack.c.l.b16 %v187
        %v380 = vpack.c.b16 %v379, %v379
        %381 = vrot.lane.b32.xlu0 %v328, 64
        %v382 = vpop.permute.xlu0 %381
        %383 = vrot.lane.b32.xlu0 %v329, 64
        %v384 = vpop.permute.xlu0 %383
        %385 = vrot.lane.b32.xlu0 %v330, 64
        %v386 = vpop.permute.xlu0 %385
        %387 = vrot.lane.b32.xlu0 %v331, 64
        %v388 = vpop.permute.xlu0 %387
        %389 = vrot.lane.b32.xlu0 %v332, 64
        %v390 = vpop.permute.xlu0 %389
        %391 = vrot.lane.b32.xlu0 %v333, 64
        %v392 = vpop.permute.xlu0 %391
        %393 = vrot.lane.b32.xlu0 %v334, 64
        %v394 = vpop.permute.xlu0 %393
        %395 = vrot.lane.b32.xlu0 %v380, 64
        %v396 = vpop.permute.xlu0 %395
        %v398 = vunpack.c.l.b16 %v188
        %v399 = vpack.c.b16 %v398, %v379
        %v401 = vshrl.u32 %v399, 16
        %v403 = vshll.u32 %v399, 16
        %v405 = vrot.slane %v403, 1
        %v406 = vor.u32 %v401, %v405
        %407 = vrot.lane.b32.xlu0 %v249, 96
        %v408 = vpop.permute.xlu0 %407
        %409 = vrot.lane.b32.xlu0 %v256, 96
        %v410 = vpop.permute.xlu0 %409
        %411 = vrot.lane.b32.xlu0 %v263, 96
        %v412 = vpop.permute.xlu0 %411
        %413 = vrot.lane.b32.xlu0 %v270, 96
        %v414 = vpop.permute.xlu0 %413
        %415 = vrot.lane.b32.xlu0 %v277, 96
        %v416 = vpop.permute.xlu0 %415
        %417 = vrot.lane.b32.xlu0 %v284, 96
        %v418 = vpop.permute.xlu0 %417
        %419 = vrot.lane.b32.xlu0 %v360, 96
        %v420 = vpop.permute.xlu0 %419
        %421 = vrot.lane.b32.xlu0 %v406, 96
        %v422 = vpop.permute.xlu0 %421
        %v423 = vrot.slane %v399, 1
        %vm424 = vcmask 261120
        %v427 = vsel %vm424, %v169, %v286
        %v430 = vsel %vm424, %v171, %v288
        %v433 = vsel %vm424, %v173, %v290
        %v436 = vsel %vm424, %v175, %v292
        %v439 = vsel %vm424, %v177, %v294
        %v442 = vsel %vm424, %v179, %v296
        %v445 = vsel %vm424, %v181, %v298
        %v448 = vsel %vm424, %v183, %v300
        %vm449 = vcmask 523264
        %v451 = vsel %vm449, %v427, %v310
        %v453 = vsel %vm449, %v430, %v312
        %v455 = vsel %vm449, %v433, %v314
        %v457 = vsel %vm449, %v436, %v316
        %v459 = vsel %vm449, %v439, %v318
        %v461 = vsel %vm449, %v442, %v320
        %v463 = vsel %vm449, %v445, %v322
        %v465 = vsel %vm449, %v448, %v324
        %vm466 = vcmask 785408
        %v468 = vsel %vm466, %v451, %v336
        %v470 = vsel %vm466, %v453, %v338
        %v472 = vsel %vm466, %v455, %v340
        %v474 = vsel %vm466, %v457, %v342
        %v476 = vsel %vm466, %v459, %v344
        %v478 = vsel %vm466, %v461, %v346
        %v480 = vsel %vm466, %v463, %v348
        %v482 = vsel %vm466, %v465, %v350
        %v485 = vsel %vm424, %v242, %v363
        %v488 = vsel %vm424, %v249, %v365
        %v491 = vsel %vm424, %v256, %v367
        %v494 = vsel %vm424, %v263, %v369
        %v497 = vsel %vm424, %v270, %v371
        %v500 = vsel %vm424, %v277, %v373
        %v503 = vsel %vm424, %v284, %v375
        %v506 = vsel %vm424, %v360, %v377
        %v508 = vsel %vm449, %v485, %v382
        %v510 = vsel %vm449, %v488, %v384
        %v512 = vsel %vm449, %v491, %v386
        %v514 = vsel %vm449, %v494, %v388
        %v516 = vsel %vm449, %v497, %v390
        %v518 = vsel %vm449, %v500, %v392
        %v520 = vsel %vm449, %v503, %v394
        %v522 = vsel %vm449, %v506, %v396
        %v524 = vsel %vm466, %v508, %v408
        %v526 = vsel %vm466, %v510, %v410
        %v528 = vsel %vm466, %v512, %v412
        %v530 = vsel %vm466, %v514, %v414
        %v532 = vsel %vm466, %v516, %v416
        %v534 = vsel %vm466, %v518, %v418
        %v536 = vsel %vm466, %v520, %v420
        %v538 = vsel %vm466, %v522, %v422
        %v555 = vunpack.c.l.b16 %v468
        %v556 = vunpack.c.l.b16 %v524
        %v557 = vunpack.c.l.b16 %v303
        %v558 = vunpack.c.l.b16 %v470
        %v559 = vunpack.c.l.b16 %v526
        %v560 = vunpack.c.l.b16 %v304
        %v561 = vunpack.c.l.b16 %v472
        %v562 = vunpack.c.l.b16 %v528
        %v563 = vunpack.c.l.b16 %v305
        %v564 = vunpack.c.l.b16 %v474
        %v565 = vunpack.c.l.b16 %v530
        %v566 = vunpack.c.l.b16 %v306
        %v567 = vunpack.c.l.b16 %v476
        %v568 = vunpack.c.l.b16 %v532
        %v569 = vunpack.c.l.b16 %v307
        %v570 = vunpack.c.l.b16 %v478
        %v571 = vunpack.c.l.b16 %v534
        %v572 = vunpack.c.l.b16 %v308
        %v573 = vunpack.c.l.b16 %v480
        %v574 = vunpack.c.l.b16 %v536
        %v575 = vunpack.c.l.b16 %v361
        %v576 = vunpack.c.l.b16 %v482
        %v577 = vunpack.c.l.b16 %v538
        %v578 = vunpack.c.l.b16 %v423
        %v579 = vld [vmem:[%s1] sm:$0xf]
        %v580 = vld [vmem:[%s1 + $0x4] sm:$0xf]
        %v581 = vld [vmem:[%s1 + $0x8] sm:$0xf]
        %v582 = vld [vmem:[%s1 + $0xc] sm:$0xf]
        %v583 = vld [vmem:[%s1 + $0x10] sm:$0xf]
        %v584 = vld [vmem:[%s1 + $0x14] sm:$0xf]
        %v585 = vld [vmem:[%s1 + $0x18] sm:$0xf]
        %v586 = vld [vmem:[%s1 + $0x1c] sm:$0xf]
        %v587 = vld [vmem:[%s1 + $0x20] sm:$0xf]
        %v588 = vld [vmem:[%s1 + $0x24] sm:$0xf]
        %v589 = vld [vmem:[%s1 + $0x28] sm:$0xf]
        %v590 = vld [vmem:[%s1 + $0x2c] sm:$0xf]
        %v591 = vld [vmem:[%s1 + $0x30] sm:$0xf]
        %v592 = vld [vmem:[%s1 + $0x34] sm:$0xf]
        %v593 = vld [vmem:[%s1 + $0x38] sm:$0xf]
        %v594 = vld [vmem:[%s1 + $0x3c] sm:$0xf]
        %v595 = vld [vmem:[%s1 + $0x40] sm:$0xf]
        %v596 = vld [vmem:[%s1 + $0x44] sm:$0xf]
        %v597 = vld [vmem:[%s1 + $0x48] sm:$0xf]
        %v598 = vld [vmem:[%s1 + $0x4c] sm:$0xf]
        %v599 = vld [vmem:[%s1 + $0x50] sm:$0xf]
        %v600 = vld [vmem:[%s1 + $0x54] sm:$0xf]
        %v601 = vld [vmem:[%s1 + $0x58] sm:$0xf]
        %v602 = vld [vmem:[%s1 + $0x5c] sm:$0xf]
        %v603 = vld [vmem:[%s1 + $0x60] sm:$0xf]
        %v604 = vld [vmem:[%s1 + $0x64] sm:$0xf]
        %v605 = vld [vmem:[%s1 + $0x68] sm:$0xf]
        %v606 = vld [vmem:[%s1 + $0x6c] sm:$0xf]
        %v607 = vld [vmem:[%s1 + $0x70] sm:$0xf]
        %v608 = vld [vmem:[%s1 + $0x74] sm:$0xf]
        %v609 = vld [vmem:[%s1 + $0x78] sm:$0xf]
        %v610 = vld [vmem:[%s1 + $0x7c] sm:$0xf]
        %v611 = vld [vmem:[%s1 + $0x80] sm:$0xf]
        %v612 = vld [vmem:[%s1 + $0x84] sm:$0xf]
        %v613 = vld [vmem:[%s1 + $0x88] sm:$0xf]
        %v614 = vld [vmem:[%s1 + $0x8c] sm:$0xf]
        %v615 = vpack.c.b16 %v558, %v555
        %v616 = vpack.c.b16 %v559, %v556
        %v617 = vpack.c.b16 %v560, %v557
        %v618 = vpack.c.b16 %v564, %v561
        %v619 = vpack.c.b16 %v565, %v562
        %v620 = vpack.c.b16 %v566, %v563
        %v621 = vpack.c.b16 %v570, %v567
        %v622 = vpack.c.b16 %v571, %v568
        %v623 = vpack.c.b16 %v572, %v569
        %v624 = vpack.c.b16 %v576, %v573
        %v625 = vpack.c.b16 %v577, %v574
        %v626 = vpack.c.b16 %v578, %v575
        %v671 = vunpack.c.l.b16 %v579
        %v672 = vunpack.c.l.b16 %v580
        %v673 = vunpack.c.l.b16 %v581
        %v674 = vunpack.c.l.b16 %v582
        %v675 = vunpack.c.l.b16 %v583
        %v676 = vunpack.c.l.b16 %v584
        %v677 = vunpack.c.l.b16 %v585
        %v678 = vunpack.c.l.b16 %v586
        %v679 = vunpack.c.l.b16 %v587
        %v680 = vunpack.c.l.b16 %v588
        %v681 = vunpack.c.l.b16 %v589
        %v682 = vunpack.c.l.b16 %v590
        %v683 = vunpack.c.l.b16 %v591
        %v684 = vunpack.c.l.b16 %v592
        %v685 = vunpack.c.l.b16 %v593
        %v686 = vunpack.c.l.b16 %v594
        %v687 = vunpack.c.l.b16 %v595
        %v688 = vunpack.c.l.b16 %v596
        %v689 = vunpack.c.l.b16 %v597
        %v690 = vunpack.c.l.b16 %v598
        %v691 = vunpack.c.l.b16 %v599
        %v692 = vunpack.c.l.b16 %v600
        %v693 = vunpack.c.l.b16 %v601
        %v694 = vunpack.c.l.b16 %v602
        %v695 = vunpack.c.l.b16 %v603
        %v696 = vunpack.c.l.b16 %v604
        %v697 = vunpack.c.l.b16 %v605
        %v698 = vunpack.c.l.b16 %v606
        %v699 = vunpack.c.l.b16 %v607
        %v700 = vunpack.c.l.b16 %v608
        %v701 = vunpack.c.l.b16 %v609
        %v702 = vunpack.c.l.b16 %v610
        %v703 = vunpack.c.l.b16 %v611
        %v704 = vunpack.c.l.b16 %v612
        %v705 = vunpack.c.l.b16 %v613
        %v706 = vunpack.c.l.b16 %v614
        %v707 = vpack.c.b16 %v672, %v671
        %v708 = vpack.c.b16 %v674, %v673
        %v709 = vpack.c.b16 %v676, %v675
        %v710 = vpack.c.b16 %v678, %v677
        %v711 = vpack.c.b16 %v680, %v679
        %v712 = vpack.c.b16 %v682, %v681
        %v713 = vpack.c.b16 %v684, %v683
        %v714 = vpack.c.b16 %v686, %v685
        %v715 = vpack.c.b16 %v688, %v687
        %v716 = vpack.c.b16 %v690, %v689
        %v717 = vpack.c.b16 %v692, %v691
        %v718 = vpack.c.b16 %v694, %v693
        %v719 = vpack.c.b16 %v696, %v695
        %v720 = vpack.c.b16 %v698, %v697
        %v721 = vpack.c.b16 %v700, %v699
        %v722 = vpack.c.b16 %v702, %v701
        %v723 = vpack.c.b16 %v704, %v703
        %v724 = vpack.c.b16 %v706, %v705
        %v744 = vsel %vm424, %v617, 0
        %v747 = vsel %vm424, %v620, 0
        %v750 = vsel %vm424, %v623, 0
        %v753 = vsel %vm424, %v626, 0
        %755 = vmatprep.subr.bf16.mxu0 0
        %756 = vmatpush1.bf16.msra.mxu0 %v714
        %757 = vmatprep.subr.bf16.mxu0 0
        %758 = vmatpush1.bf16.msra.mxu0 %v713
        %759 = vmatprep.subr.bf16.mxu0 0
        %760 = vmatpush1.bf16.msra.mxu0 %v712
        %761 = vmatprep.subr.bf16.mxu0 0
        %762 = vmatpush1.bf16.msra.mxu0 %v711
        %763 = vmatprep.subr.bf16.mxu0 0
        %764 = vmatpush1.bf16.msra.mxu0 %v710
        %765 = vmatprep.subr.bf16.mxu0 0
        %766 = vmatpush1.bf16.msra.mxu0 %v709
        %767 = vmatprep.subr.bf16.mxu0 0
        %768 = vmatpush1.bf16.msra.mxu0 %v708
        %769 = vmatprep.subr.bf16.mxu0 0
        %770 = vmatpush1.bf16.msra.mxu0 %v707
        %771 = vmatprep.subr.bf16.mxu0 0
        %772 = vmatpush2.bf16.msra.mxu0 %v722
        %773 = vmatprep.subr.bf16.mxu0 0
        %774 = vmatpush2.bf16.msra.mxu0 %v721
        %775 = vmatprep.subr.bf16.mxu0 0
        %776 = vmatpush2.bf16.msra.mxu0 %v720
        %777 = vmatprep.subr.bf16.mxu0 0
        %778 = vmatpush2.bf16.msra.mxu0 %v719
        %779 = vmatprep.subr.bf16.mxu0 0
        %780 = vmatpush2.bf16.msra.mxu0 %v718
        %781 = vmatprep.subr.bf16.mxu0 0
        %782 = vmatpush2.bf16.msra.mxu0 %v717
        %783 = vmatprep.subr.bf16.mxu0 0
        %784 = vmatpush2.bf16.msra.mxu0 %v716
        %785 = vmatprep.subr.bf16.mxu0 0
        %786 = vmatpush2.bf16.msra.mxu0 %v715
        %787 = vmatprep.mubr.bf16.mxu0 %v616
        %788 = vmatmul.mubr.bf16.gmra.mxu0 %v615
        %v789 = vpop.f32.mrf.mxu0
        %v790 = vadd.f32 0.0, %v789
        %v791 = vpop.f32.mrf.mxu0
        %v792 = vpop.f32.mrf.mxu0
        %v793 = vadd.f32 0.0, %v792
        %v794 = vpop.f32.mrf.mxu0
        %795 = vmatprep.mubr.bf16.mxu0 %v619
        %796 = vmatmul.mubr.bf16.gmra.mxu0 %v618
        %v797 = vpop.f32.mrf.mxu0
        %v798 = vadd.f32 0.0, %v797
        %v799 = vpop.f32.mrf.mxu0
        %v800 = vpop.f32.mrf.mxu0
        %v801 = vadd.f32 0.0, %v800
        %v802 = vpop.f32.mrf.mxu0
        %803 = vmatprep.mubr.bf16.mxu0 %v622
        %804 = vmatmul.mubr.bf16.gmra.mxu0 %v621
        %v805 = vpop.f32.mrf.mxu0
        %v806 = vadd.f32 0.0, %v805
        %v807 = vpop.f32.mrf.mxu0
        %v808 = vpop.f32.mrf.mxu0
        %v809 = vadd.f32 0.0, %v808
        %v810 = vpop.f32.mrf.mxu0
        %811 = vmatprep.mubr.bf16.mxu0 %v625
        %812 = vmatmul.mubr.bf16.gmra.mxu0 %v624
        %v813 = vpop.f32.mrf.mxu0
        %v814 = vadd.f32 0.0, %v813
        %v815 = vpop.f32.mrf.mxu0
        %v816 = vpop.f32.mrf.mxu0
        %v817 = vadd.f32 0.0, %v816
        %v818 = vpop.f32.mrf.mxu0
        %819 = vdwg.mxu0
        %820 = vmatprep.subr.bf16.mxu0 0
        %821 = vmatpush1.bf16.msra.mxu0 0
        %822 = vmatprep.subr.bf16.mxu0 0
        %823 = vmatpush1.bf16.msra.mxu0 0
        %824 = vmatprep.subr.bf16.mxu0 0
        %825 = vmatpush1.bf16.msra.mxu0 0
        %826 = vmatprep.subr.bf16.mxu0 0
        %827 = vmatpush1.bf16.msra.mxu0 0
        %828 = vmatprep.subr.bf16.mxu0 0
        %829 = vmatpush1.bf16.msra.mxu0 0
        %830 = vmatprep.subr.bf16.mxu0 0
        %831 = vmatpush1.bf16.msra.mxu0 0
        %832 = vmatprep.subr.bf16.mxu0 0
        %833 = vmatpush1.bf16.msra.mxu0 %v724
        %834 = vmatprep.subr.bf16.mxu0 0
        %835 = vmatpush1.bf16.msra.mxu0 %v723
        %836 = vmatprep.subr.bf16.mxu0 0
        %837 = vmatpush2.bf16.msra.mxu0 0
        %838 = vmatprep.subr.bf16.mxu0 0
        %839 = vmatpush2.bf16.msra.mxu0 0
        %840 = vmatprep.subr.bf16.mxu0 0
        %841 = vmatpush2.bf16.msra.mxu0 0
        %842 = vmatprep.subr.bf16.mxu0 0
        %843 = vmatpush2.bf16.msra.mxu0 0
        %844 = vmatprep.subr.bf16.mxu0 0
        %845 = vmatpush2.bf16.msra.mxu0 0
        %846 = vmatprep.subr.bf16.mxu0 0
        %847 = vmatpush2.bf16.msra.mxu0 0
        %848 = vmatprep.subr.bf16.mxu0 0
        %849 = vmatpush2.bf16.msra.mxu0 0
        %850 = vmatprep.subr.bf16.mxu0 0
        %851 = vmatpush2.bf16.msra.mxu0 0
        %852 = vmatprep.mubr.bf16.mxu0 0
        %853 = vmatmul.mubr.bf16.gmra.mxu0 %v744
        %v854 = vpop.f32.mrf.mxu0
        %v855 = vadd.f32 %v790, %v854
        %v856 = vpop.f32.mrf.mxu0
        %v857 = vpop.f32.mrf.mxu0
        %v858 = vadd.f32 %v793, %v857
        %v859 = vpop.f32.mrf.mxu0
        %860 = vmatprep.mubr.bf16.mxu0 0
        %861 = vmatmul.mubr.bf16.gmra.mxu0 %v747
        %v862 = vpop.f32.mrf.mxu0
        %v863 = vadd.f32 %v798, %v862
        %v864 = vpop.f32.mrf.mxu0
        %v865 = vpop.f32.mrf.mxu0
        %v866 = vadd.f32 %v801, %v865
        %v867 = vpop.f32.mrf.mxu0
        %868 = vmatprep.mubr.bf16.mxu0 0
        %869 = vmatmul.mubr.bf16.gmra.mxu0 %v750
        %v870 = vpop.f32.mrf.mxu0
        %v871 = vadd.f32 %v806, %v870
        %v872 = vpop.f32.mrf.mxu0
        %v873 = vpop.f32.mrf.mxu0
        %v874 = vadd.f32 %v809, %v873
        %v875 = vpop.f32.mrf.mxu0
        %876 = vmatprep.mubr.bf16.mxu0 0
        %877 = vmatmul.mubr.bf16.gmra.mxu0 %v753
        %v878 = vpop.f32.mrf.mxu0
        %v879 = vadd.f32 %v814, %v878
        %v880 = vpop.f32.mrf.mxu0
        %v881 = vpop.f32.mrf.mxu0
        %v882 = vadd.f32 %v817, %v881
        %v883 = vpop.f32.mrf.mxu0
        %884 = vdwg.mxu0
        %885 = vst [vmem:[%s160] sm:$0xff] %v855
        %886 = vst [vmem:[%s160 + $0x8] sm:$0xff] %v858
        %887 = vst [vmem:[%s160 + $0x10] sm:$0xff] %v863
        %888 = vst [vmem:[%s160 + $0x18] sm:$0xff] %v866
        %889 = vst [vmem:[%s160 + $0x20] sm:$0xff] %v871
        %890 = vst [vmem:[%s160 + $0x28] sm:$0xff] %v874
        %891 = vst [vmem:[%s160 + $0x30] sm:$0xff] %v879
        %892 = vst [vmem:[%s160 + $0x38] sm:$0xff] %v882
        %v893 = vadd.f32 %v855, %v858
        %v894 = vadd.f32 %v893, %v863
        %v895 = vadd.f32 %v894, %v866
        %v896 = vadd.f32 %v895, %v871
        %v897 = vadd.f32 %v896, %v874
        %v898 = vadd.f32 %v897, %v879
        %v899 = vadd.f32 %v898, %v882
        %v900 = vrot.slane %v899, 4
        %v901 = vadd.f32 %v899, %v900
        %v902 = vrot.slane %v901, 2
        %v903 = vadd.f32 %v901, %v902
        %v904 = vrot.slane %v903, 1
        %v905 = vadd.f32 %v903, %v904
        %v906 = vmul.f32 %v855, %v855
        %v907 = vmul.f32 %v858, %v858
        %v908 = vmul.f32 %v863, %v863
        %v909 = vmul.f32 %v866, %v866
        %v910 = vmul.f32 %v871, %v871
        %v911 = vmul.f32 %v874, %v874
        %v912 = vmul.f32 %v879, %v879
        %v913 = vmul.f32 %v882, %v882
        %v914 = vadd.f32 %v906, %v907
        %v915 = vadd.f32 %v914, %v908
        %v916 = vadd.f32 %v915, %v909
        %v917 = vadd.f32 %v916, %v910
        %v918 = vadd.f32 %v917, %v911
        %v919 = vadd.f32 %v918, %v912
        %v920 = vadd.f32 %v919, %v913
        %v921 = vrot.slane %v920, 4
        %v922 = vadd.f32 %v920, %v921
        %v923 = vrot.slane %v922, 2
        %v924 = vadd.f32 %v922, %v923
        %v925 = vrot.slane %v924, 1
        %v926 = vadd.f32 %v924, %v925
        %vm927 = vcmask 1040384
        %v928 = vsel %vm927, %v905, %v926
        %p929 = scmp.eq.s32.totalorder %s19, 0
        // Predicated region
        $region29: #{tpu_custom_call.1} parent=27 // pred_check
          %p930 = pneg %p929
        $region30: #{tpu_custom_call.1} parent=27 // pred_check_branch
          %932 = sbr.rel (%p930) target = $region32
        $region31: #{tpu_custom_call.1} parent=27 // pred_region
          %933 = vst [vmem:[#allocation4] sm:$0x3] 0.0
        $region32: #{tpu_custom_call.1} parent=27 // pred_fallthru
          _
        %v934 = vld [vmem:[#allocation4] sm:$0x3]
        %v935 = vadd.f32 %v934, %v928
        %936 = vst [vmem:[#allocation4] sm:$0x3] %v935
        %s937 = sand.u32 %s74, 1
        %s938 = scalar_lea.sflag [#allocation3], %s937
        %s939 = sand.u32 %s74, 1
        %s940 = smul.addr %s939, 64
        %s941 = scalar_lea.vmem [#allocation2], %s940
        // Predicated region
        $region33: #{tpu_custom_call.1} parent=27 // pred_check
          %p942 = pneg %p84
        $region34: #{tpu_custom_call.1} parent=27 // pred_check_branch
          %944 = sbr.rel (%p942) target = $region36
        $region35: #{tpu_custom_call.1} parent=27 // pred_region
          %s946 = ssub.s32 1024, 1024
          %947 = vsyncadd %s938, %s946
          %s948 = smul.addr %s19, 8
          %s949 = smul.addr %s948, 128
          %s950 = scalar_lea.hbm %s2, %s949
          %s951 = sshll.u32 %s941, 4
          %s952 = int_to_ptr.vmem [resolvable:$true] %s951
          %957 = dma.vmem_to_hbm [thread:$0]  %s952, 1024, %s950, %s938, 128, 128, 8
        $region36: #{tpu_custom_call.1} parent=27 // pred_fallthru
          _
        // Predicated region
        $region37: #{tpu_custom_call.1} parent=27 // pred_check
          %p958 = pneg %p105
        $region38: #{tpu_custom_call.1} parent=27 // pred_check_branch
          %960 = sbr.rel (%p958) target = $region40
        $region39: #{tpu_custom_call.1} parent=27 // pred_region
          %s962 = ssub.s32 32, 32
          %963 = vsyncadd [#allocation5], %s962
          %s965 = sshll.u32 [#allocation4], 4
          %s966 = int_to_ptr.vmem [resolvable:$true] %s965
          %968 = dma.vmem_to_hbm [thread:$0]  %s966, 32, %s3, [#allocation5]
        $region40: #{tpu_custom_call.1} parent=27 // pred_fallthru
          _
        // Predicated region
        $region41: #{tpu_custom_call.1} parent=27 // pred_check
          %p969 = pneg %p105
        $region42: #{tpu_custom_call.1} parent=27 // pred_check_branch
          %971 = sbr.rel (%p969) target = $region44
        $region43: #{tpu_custom_call.1} parent=27 // pred_region
          %972 = dma.done [#allocation5], 32
        $region44: #{tpu_custom_call.1} parent=27 // pred_fallthru
          _
      $region28: #{tpu_custom_call.1} parent=5 // pred_fallthru
        _
      %p973 = scmp.le.s32.totalorder 2, %s14
      // Predicated region
      $region45: #{tpu_custom_call.1} parent=5 // pred_check
        %p974 = pneg %p973
      $region46: #{tpu_custom_call.1} parent=5 // pred_check_branch
        %976 = sbr.rel (%p974) target = $region48
      $region47: #{tpu_custom_call.1} parent=5 // pred_region
        %s977 = ssub.s32 %s14, 2
        // Predicated region
        $region49: #{tpu_custom_call.1} parent=47 // pred_check
          %p978 = pneg %p90
        $region50: #{tpu_custom_call.1} parent=47 // pred_check_branch
          %980 = sbr.rel (%p978) target = $region52
        $region51: #{tpu_custom_call.1} parent=47 // pred_region
          %s981 = sand.u32 %s75, 1
          %s982 = scalar_lea.sflag [#allocation3], %s981
          %s983 = sand.u32 %s75, 1
          %s984 = smul.addr %s983, 64
          %s985 = scalar_lea.vmem [#allocation2], %s984
          %986 = dma.done %s982, 1024
        $region52: #{tpu_custom_call.1} parent=47 // pred_fallthru
          _
      $region48: #{tpu_custom_call.1} parent=5 // pred_fallthru
        _
    $region6: #{tpu_custom_call.1} parent=1 // loop_footer
      %s18 = sadd.s32 1, %s14
    $region7: #{tpu_custom_call.1} parent=1 // loop_footer_branch
      %13 = sbr.rel target = $region3
    $region8: #{tpu_custom_call.1} parent=1 // loop_exit
      _
    %987 = vsyncpa [#allocation3], 1
    %s988 = scalar_lea.sflag [#allocation3], 1
    %989 = vsyncpa %s988, 1
    %990 = vsyncpa [#allocation5], 1

</llo_original>
